<compile_context>
chip_gen: v5e
topology: v5e:2x2
jax: 0.10.0
libtpu: 0.0.40
codegen_flags: <defaults>
</compile_context>

<pallas_src>
import functools

import jax
import jax.numpy as jnp
from jax.experimental import pallas as pl
from jax.experimental.pallas import tpu as pltpu

# ---- GPT-Neo "config" (small, synthetic) --------------------------------------
HIDDEN = 32          # config.hidden_size
NUM_HEADS = 4        # config.num_heads
HEAD_DIM = HIDDEN // NUM_HEADS
SEQ = 8              # sequence length (<= max_position_embeddings)
BATCH = 2
MASKED_BIAS = -1e9   # registered buffer in the torch module


def _gpt_neo_attn_kernel(x_ref, wqkv_ref, wo_ref, bo_ref, bias_ref, o_ref, *,
                         num_heads, head_dim):
    """One grid step == one batch element.

    x_ref:    (S, E)    hidden states for this batch element
    wqkv_ref: (E, 3E)   fused [Wq^T | Wk^T | Wv^T] (resident across grid steps)
    wo_ref:   (E, E)    Wo^T
    bo_ref:   (1, E)    out_proj bias
    bias_ref: (S, S)    additive causal bias (0 on/below diagonal, -1e9 above)
    o_ref:    (S, E)    output
    """
    e = num_heads * head_dim

    x = x_ref[...]                    # (S, E) float32
    wo = wo_ref[...]                  # (E, E)
    bias = bias_ref[...]              # (S, S)

    # ---- fused q/k/v projection: one MXU push (S, E) @ (E, 3E), no bias ----
    qkv = jnp.dot(x, wqkv_ref[...], preferred_element_type=jnp.float32)   # (S, 3E)

    seq = x.shape[0]
    acc = jnp.zeros((seq, e), dtype=jnp.float32)

    # ---- per-head attention (static unroll, H=4); merge_heads + out_proj folded ----
    # TODO(synk): at real head_dim/seq, replace with lane-aligned head blocks, a single
    # full-K out-proj, and flash-style K/V tiling (see header scaling notes).
    for h in range(num_heads):
        lo = h * head_dim
        q_h = qkv[:, lo:lo + head_dim]                          # (S, D)
        k_h = qkv[:, e + lo:e + lo + head_dim]                  # (S, D)
        v_h = qkv[:, 2 * e + lo:2 * e + lo + head_dim]          # (S, D)

        # GPT-Neo has NO 1/sqrt(d) scaling.
        s = jnp.einsum('qd,kd->qk', q_h, k_h,
                       preferred_element_type=jnp.float32)      # (S, S)
        s = s + bias                                            # additive causal mask
        m = jnp.max(s, axis=-1, keepdims=True)
        p = jnp.exp(s - m)
        p = p / jnp.sum(p, axis=-1, keepdims=True)              # exact f32 softmax

        # attn_dropout is identity (eval)
        ctx = jnp.dot(p, v_h, preferred_element_type=jnp.float32)        # (S, D)

        # merge_heads + out_proj fold: ctx_h @ Wo^T[h*D:(h+1)*D, :]
        acc = acc + jnp.dot(ctx, wo[lo:lo + head_dim, :],
                            preferred_element_type=jnp.float32)          # (S, E)

    # out_proj bias; resid_dropout is identity (eval)
    o_ref[...] = (acc + bo_ref[...]).astype(o_ref.dtype)


def gpt_neo_attention(hidden_states, wqkv, wo_t, bo, causal_bias):
    """hidden_states: (B, S, E); wqkv: (E, 3E) pre-fused; wo_t: (E, E); bo: (E,);
    causal_bias: (S, S) additive mask, all precomputed at parameter-load time."""
    b, s, e = hidden_states.shape
    h, d = NUM_HEADS, e // NUM_HEADS
    bo2 = bo.reshape(1, e)

    kernel = functools.partial(_gpt_neo_attn_kernel, num_heads=h, head_dim=d)

    flops = (2 * b * s * e * (3 * e)        # qkv projection
             + 4 * b * h * s * s * d        # scores + attn @ v
             + 2 * b * s * e * e)           # out projection
    bytes_accessed = 4 * (b * s * e + e * 3 * e + e * e + e + s * s + b * s * e)

    out = pl.pallas_call(
        kernel,
        out_shape=jax.ShapeDtypeStruct((b, s, e), hidden_states.dtype),
        grid=(b,),
        in_specs=[
            pl.BlockSpec((None, s, e), lambda i: (i, 0, 0)),   # x: per-batch block
            pl.BlockSpec((e, 3 * e), lambda i: (0, 0)),        # Wqkv: resident
            pl.BlockSpec((e, e), lambda i: (0, 0)),            # Wo^T: resident
            pl.BlockSpec((1, e), lambda i: (0, 0)),            # out_proj bias
            pl.BlockSpec((s, s), lambda i: (0, 0)),            # additive causal bias
        ],
        out_specs=pl.BlockSpec((None, s, e), lambda i: (i, 0, 0)),
        compiler_params=pltpu.CompilerParams(
            dimension_semantics=("parallel",),      # batch steps shard across TCs (v7x)
            vmem_limit_bytes=32 * 1024 * 1024,
        ),
        cost_estimate=pl.CostEstimate(
            flops=flops,
            transcendentals=b * h * s * s,
            bytes_accessed=bytes_accessed,
        ),
    )(hidden_states, wqkv, wo_t, bo2, causal_bias)
    return out


# ------------------------- pure-JAX reference (for checking) -------------------
def _reference(hidden_states, wq_t, wk_t, wv_t, wo_t, bo):
    b, s, e = hidden_states.shape
    q = hidden_states @ wq_t
    k = hidden_states @ wk_t
    v = hidden_states @ wv_t

    def split(x):  # (B, S, E) -> (B, H, S, D)
        return x.reshape(b, s, NUM_HEADS, HEAD_DIM).transpose(0, 2, 1, 3)

    qh, kh, vh = split(q), split(k), split(v)
    w = jnp.einsum("bhqd,bhkd->bhqk", qh.astype(jnp.float32), kh.astype(jnp.float32))
    causal = jnp.tril(jnp.ones((s, s), dtype=bool))
    w = jnp.where(causal[None, None], w, jnp.float32(MASKED_BIAS))
    p = jax.nn.softmax(w, axis=-1).astype(v.dtype)
    a = jnp.einsum("bhqk,bhkd->bhqd", p, vh)
    a = a.transpose(0, 2, 1, 3).reshape(b, s, e)
    return a @ wo_t + bo[None, None, :]


if __name__ == "__main__":
    key = jax.random.PRNGKey(0)
    kx, kq, kk, kv, ko, kb = jax.random.split(key, 6)

    hidden_states = jax.random.normal(kx, (BATCH, SEQ, HIDDEN), dtype=jnp.float32)
    # nn.Linear weight is (out, in); we deterministically init and pass the transpose (in, out).
    wq_t = (jax.random.normal(kq, (HIDDEN, HIDDEN), dtype=jnp.float32) * 0.02).T
    wk_t = (jax.random.normal(kk, (HIDDEN, HIDDEN), dtype=jnp.float32) * 0.02).T
    wv_t = (jax.random.normal(kv, (HIDDEN, HIDDEN), dtype=jnp.float32) * 0.02).T
    wo_t = (jax.random.normal(ko, (HIDDEN, HIDDEN), dtype=jnp.float32) * 0.02).T
    bo = jax.random.normal(kb, (HIDDEN,), dtype=jnp.float32) * 0.02

    # ---- "parameter-load time" precomputation (NOT on the per-forward path) ----
    wqkv = jnp.concatenate([wq_t, wk_t, wv_t], axis=1)                  # (E, 3E)
    causal = jnp.tril(jnp.ones((SEQ, SEQ), dtype=bool))
    causal_bias = jnp.where(causal, 0.0, MASKED_BIAS).astype(jnp.float32)  # (S, S)

    out = gpt_neo_attention(hidden_states, wqkv, wo_t, bo, causal_bias)
    out = jax.block_until_ready(out)

    ref = _reference(hidden_states, wq_t, wk_t, wv_t, wo_t, bo)
    assert out.shape == (BATCH, SEQ, HIDDEN)
    assert jnp.allclose(out, ref, atol=1e-4, rtol=1e-4), float(jnp.max(jnp.abs(out - ref)))

    # TODO(synk): the 'local' (GPTNeoLocalSelfAttention) windowed branch and the
    # layer_past/use_cache/attention_mask/head_mask plumbing are not implemented here;
    # this kernel implements the 'global' branch in eval mode (dropout = identity).
    print("KERNEL_OK")
</pallas_src>

<mosaic_0001>
module attributes {stable_mosaic.version = 11 : i64} {
  func.func @_gpt_neo_attn_kernel(%arg0: i32, %arg1: memref<1x8x32xf32, #tpu.memory_space<vmem>>, %arg2: memref<32x96xf32, #tpu.memory_space<vmem>>, %arg3: memref<32x32xf32, #tpu.memory_space<vmem>>, %arg4: memref<1x32xf32, #tpu.memory_space<vmem>>, %arg5: memref<8x8xf32, #tpu.memory_space<vmem>>, %arg6: memref<1x8x32xf32, #tpu.memory_space<vmem>>) attributes {dimension_semantics = [#tpu.dimension_semantics<parallel>], iteration_bounds = array<i64: 2>, scalar_prefetch = 0 : i64, scratch_operands = 0 : i64, tpu.core_type = #tpu.core_type<tc>, window_params = [{transform_indices = @transform_0, window_bounds = array<i64: 1, 8, 32>}, {pipeline_mode = #tpu.pipeline_mode<synchronous>, transform_indices = @transform_1, window_bounds = array<i64: 32, 96>}, {pipeline_mode = #tpu.pipeline_mode<synchronous>, transform_indices = @transform_2, window_bounds = array<i64: 32, 32>}, {pipeline_mode = #tpu.pipeline_mode<synchronous>, transform_indices = @transform_3, window_bounds = array<i64: 1, 32>}, {pipeline_mode = #tpu.pipeline_mode<synchronous>, transform_indices = @transform_4, window_bounds = array<i64: 8, 8>}, {transform_indices = @transform_5, window_bounds = array<i64: 1, 8, 32>}]} {
    %c0 = arith.constant 0 : index
    %c0_0 = arith.constant 0 : index
    %c0_1 = arith.constant 0 : index
    %0 = vector.load %arg1[%c0, %c0_0, %c0_1] : memref<1x8x32xf32, #tpu.memory_space<vmem>>, vector<1x8x32xf32>
    %1 = vector.shape_cast %0 : vector<1x8x32xf32> to vector<8x32xf32>
    %c0_2 = arith.constant 0 : index
    %c0_3 = arith.constant 0 : index
    %2 = vector.load %arg3[%c0_2, %c0_3] : memref<32x32xf32, #tpu.memory_space<vmem>>, vector<32x32xf32>
    %c0_4 = arith.constant 0 : index
    %c0_5 = arith.constant 0 : index
    %3 = vector.load %arg5[%c0_4, %c0_5] : memref<8x8xf32, #tpu.memory_space<vmem>>, vector<8x8xf32>
    %c0_6 = arith.constant 0 : index
    %c0_7 = arith.constant 0 : index
    %4 = vector.load %arg2[%c0_6, %c0_7] : memref<32x96xf32, #tpu.memory_space<vmem>>, vector<32x96xf32>
    %cst = arith.constant dense<0.000000e+00> : vector<8x96xf32>
    %5 = tpu.matmul %1, %4, %cst {dimension_numbers = #tpu.dot_dimension_numbers<[1], [0], [0], [1], [0, 0, 1, 1], [], []>} : vector<8x32xf32>, vector<32x96xf32>, vector<8x96xf32> -> vector<8x96xf32>
    %cst_8 = arith.constant 0.000000e+00 : f32
    %6 = vector.broadcast %cst_8 : f32 to vector<8x32xf32>
    %7 = vector.extract_strided_slice %5 {offsets = [0, 0], sizes = [8, 8], strides = [1, 1]} : vector<8x96xf32> to vector<8x8xf32>
    %8 = vector.extract_strided_slice %5 {offsets = [0, 32], sizes = [8, 8], strides = [1, 1]} : vector<8x96xf32> to vector<8x8xf32>
    %9 = vector.extract_strided_slice %5 {offsets = [0, 64], sizes = [8, 8], strides = [1, 1]} : vector<8x96xf32> to vector<8x8xf32>
    "tpu.trace_start"() <{level = 10 : i32, message = "qd,kd->qk"}> : () -> ()
    %cst_9 = arith.constant dense<0.000000e+00> : vector<8x8xf32>
    %10 = tpu.matmul %7, %8, %cst_9 {dimension_numbers = #tpu.dot_dimension_numbers<[1], [1], [0], [0], [0, 0, 1, 0], [], []>} : vector<8x8xf32>, vector<8x8xf32>, vector<8x8xf32> -> vector<8x8xf32>
    "tpu.trace_stop"() : () -> ()
    %11 = arith.addf %10, %3 : vector<8x8xf32>
    %cst_10 = arith.constant dense<0xFF800000> : vector<8xf32>
    %12 = vector.multi_reduction <maximumf>, %11, %cst_10 [1] : vector<8x8xf32> to vector<8xf32>
    %13 = vector.shape_cast %12 : vector<8xf32> to vector<8x1xf32>
    %14 = vector.broadcast %13 : vector<8x1xf32> to vector<8x8xf32>
    %15 = arith.subf %11, %14 : vector<8x8xf32>
    %16 = math.exp %15 : vector<8x8xf32>
    %cst_11 = arith.constant dense<0.000000e+00> : vector<8xf32>
    %17 = vector.multi_reduction <add>, %16, %cst_11 [1] : vector<8x8xf32> to vector<8xf32>
    %18 = vector.shape_cast %17 : vector<8xf32> to vector<8x1xf32>
    %19 = vector.broadcast %18 : vector<8x1xf32> to vector<8x8xf32>
    %20 = arith.divf %16, %19 : vector<8x8xf32>
    %cst_12 = arith.constant dense<0.000000e+00> : vector<8x8xf32>
    %21 = tpu.matmul %20, %9, %cst_12 {dimension_numbers = #tpu.dot_dimension_numbers<[1], [0], [0], [1], [0, 0, 1, 1], [], []>} : vector<8x8xf32>, vector<8x8xf32>, vector<8x8xf32> -> vector<8x8xf32>
    %22 = vector.extract_strided_slice %2 {offsets = [0, 0], sizes = [8, 32], strides = [1, 1]} : vector<32x32xf32> to vector<8x32xf32>
    %cst_13 = arith.constant dense<0.000000e+00> : vector<8x32xf32>
    %23 = tpu.matmul %21, %22, %cst_13 {dimension_numbers = #tpu.dot_dimension_numbers<[1], [0], [0], [1], [0, 0, 1, 1], [], []>} : vector<8x8xf32>, vector<8x32xf32>, vector<8x32xf32> -> vector<8x32xf32>
    %24 = arith.addf %6, %23 : vector<8x32xf32>
    %25 = vector.extract_strided_slice %5 {offsets = [0, 8], sizes = [8, 8], strides = [1, 1]} : vector<8x96xf32> to vector<8x8xf32>
    %26 = vector.extract_strided_slice %5 {offsets = [0, 40], sizes = [8, 8], strides = [1, 1]} : vector<8x96xf32> to vector<8x8xf32>
    %27 = vector.extract_strided_slice %5 {offsets = [0, 72], sizes = [8, 8], strides = [1, 1]} : vector<8x96xf32> to vector<8x8xf32>
    "tpu.trace_start"() <{level = 10 : i32, message = "qd,kd->qk"}> : () -> ()
    %cst_14 = arith.constant dense<0.000000e+00> : vector<8x8xf32>
    %28 = tpu.matmul %25, %26, %cst_14 {dimension_numbers = #tpu.dot_dimension_numbers<[1], [1], [0], [0], [0, 0, 1, 0], [], []>} : vector<8x8xf32>, vector<8x8xf32>, vector<8x8xf32> -> vector<8x8xf32>
    "tpu.trace_stop"() : () -> ()
    %29 = arith.addf %28, %3 : vector<8x8xf32>
    %cst_15 = arith.constant dense<0xFF800000> : vector<8xf32>
    %30 = vector.multi_reduction <maximumf>, %29, %cst_15 [1] : vector<8x8xf32> to vector<8xf32>
    %31 = vector.shape_cast %30 : vector<8xf32> to vector<8x1xf32>
    %32 = vector.broadcast %31 : vector<8x1xf32> to vector<8x8xf32>
    %33 = arith.subf %29, %32 : vector<8x8xf32>
    %34 = math.exp %33 : vector<8x8xf32>
    %cst_16 = arith.constant dense<0.000000e+00> : vector<8xf32>
    %35 = vector.multi_reduction <add>, %34, %cst_16 [1] : vector<8x8xf32> to vector<8xf32>
    %36 = vector.shape_cast %35 : vector<8xf32> to vector<8x1xf32>
    %37 = vector.broadcast %36 : vector<8x1xf32> to vector<8x8xf32>
    %38 = arith.divf %34, %37 : vector<8x8xf32>
    %cst_17 = arith.constant dense<0.000000e+00> : vector<8x8xf32>
    %39 = tpu.matmul %38, %27, %cst_17 {dimension_numbers = #tpu.dot_dimension_numbers<[1], [0], [0], [1], [0, 0, 1, 1], [], []>} : vector<8x8xf32>, vector<8x8xf32>, vector<8x8xf32> -> vector<8x8xf32>
    %40 = vector.extract_strided_slice %2 {offsets = [8, 0], sizes = [8, 32], strides = [1, 1]} : vector<32x32xf32> to vector<8x32xf32>
    %cst_18 = arith.constant dense<0.000000e+00> : vector<8x32xf32>
    %41 = tpu.matmul %39, %40, %cst_18 {dimension_numbers = #tpu.dot_dimension_numbers<[1], [0], [0], [1], [0, 0, 1, 1], [], []>} : vector<8x8xf32>, vector<8x32xf32>, vector<8x32xf32> -> vector<8x32xf32>
    %42 = arith.addf %24, %41 : vector<8x32xf32>
    %43 = vector.extract_strided_slice %5 {offsets = [0, 16], sizes = [8, 8], strides = [1, 1]} : vector<8x96xf32> to vector<8x8xf32>
    %44 = vector.extract_strided_slice %5 {offsets = [0, 48], sizes = [8, 8], strides = [1, 1]} : vector<8x96xf32> to vector<8x8xf32>
    %45 = vector.extract_strided_slice %5 {offsets = [0, 80], sizes = [8, 8], strides = [1, 1]} : vector<8x96xf32> to vector<8x8xf32>
    "tpu.trace_start"() <{level = 10 : i32, message = "qd,kd->qk"}> : () -> ()
    %cst_19 = arith.constant dense<0.000000e+00> : vector<8x8xf32>
    %46 = tpu.matmul %43, %44, %cst_19 {dimension_numbers = #tpu.dot_dimension_numbers<[1], [1], [0], [0], [0, 0, 1, 0], [], []>} : vector<8x8xf32>, vector<8x8xf32>, vector<8x8xf32> -> vector<8x8xf32>
    "tpu.trace_stop"() : () -> ()
    %47 = arith.addf %46, %3 : vector<8x8xf32>
    %cst_20 = arith.constant dense<0xFF800000> : vector<8xf32>
    %48 = vector.multi_reduction <maximumf>, %47, %cst_20 [1] : vector<8x8xf32> to vector<8xf32>
    %49 = vector.shape_cast %48 : vector<8xf32> to vector<8x1xf32>
    %50 = vector.broadcast %49 : vector<8x1xf32> to vector<8x8xf32>
    %51 = arith.subf %47, %50 : vector<8x8xf32>
    %52 = math.exp %51 : vector<8x8xf32>
    %cst_21 = arith.constant dense<0.000000e+00> : vector<8xf32>
    %53 = vector.multi_reduction <add>, %52, %cst_21 [1] : vector<8x8xf32> to vector<8xf32>
    %54 = vector.shape_cast %53 : vector<8xf32> to vector<8x1xf32>
    %55 = vector.broadcast %54 : vector<8x1xf32> to vector<8x8xf32>
    %56 = arith.divf %52, %55 : vector<8x8xf32>
    %cst_22 = arith.constant dense<0.000000e+00> : vector<8x8xf32>
    %57 = tpu.matmul %56, %45, %cst_22 {dimension_numbers = #tpu.dot_dimension_numbers<[1], [0], [0], [1], [0, 0, 1, 1], [], []>} : vector<8x8xf32>, vector<8x8xf32>, vector<8x8xf32> -> vector<8x8xf32>
    %58 = vector.extract_strided_slice %2 {offsets = [16, 0], sizes = [8, 32], strides = [1, 1]} : vector<32x32xf32> to vector<8x32xf32>
    %cst_23 = arith.constant dense<0.000000e+00> : vector<8x32xf32>
    %59 = tpu.matmul %57, %58, %cst_23 {dimension_numbers = #tpu.dot_dimension_numbers<[1], [0], [0], [1], [0, 0, 1, 1], [], []>} : vector<8x8xf32>, vector<8x32xf32>, vector<8x32xf32> -> vector<8x32xf32>
    %60 = arith.addf %42, %59 : vector<8x32xf32>
    %61 = vector.extract_strided_slice %5 {offsets = [0, 24], sizes = [8, 8], strides = [1, 1]} : vector<8x96xf32> to vector<8x8xf32>
    %62 = vector.extract_strided_slice %5 {offsets = [0, 56], sizes = [8, 8], strides = [1, 1]} : vector<8x96xf32> to vector<8x8xf32>
    %63 = vector.extract_strided_slice %5 {offsets = [0, 88], sizes = [8, 8], strides = [1, 1]} : vector<8x96xf32> to vector<8x8xf32>
    "tpu.trace_start"() <{level = 10 : i32, message = "qd,kd->qk"}> : () -> ()
    %cst_24 = arith.constant dense<0.000000e+00> : vector<8x8xf32>
    %64 = tpu.matmul %61, %62, %cst_24 {dimension_numbers = #tpu.dot_dimension_numbers<[1], [1], [0], [0], [0, 0, 1, 0], [], []>} : vector<8x8xf32>, vector<8x8xf32>, vector<8x8xf32> -> vector<8x8xf32>
    "tpu.trace_stop"() : () -> ()
    %65 = arith.addf %64, %3 : vector<8x8xf32>
    %cst_25 = arith.constant dense<0xFF800000> : vector<8xf32>
    %66 = vector.multi_reduction <maximumf>, %65, %cst_25 [1] : vector<8x8xf32> to vector<8xf32>
    %67 = vector.shape_cast %66 : vector<8xf32> to vector<8x1xf32>
    %68 = vector.broadcast %67 : vector<8x1xf32> to vector<8x8xf32>
    %69 = arith.subf %65, %68 : vector<8x8xf32>
    %70 = math.exp %69 : vector<8x8xf32>
    %cst_26 = arith.constant dense<0.000000e+00> : vector<8xf32>
    %71 = vector.multi_reduction <add>, %70, %cst_26 [1] : vector<8x8xf32> to vector<8xf32>
    %72 = vector.shape_cast %71 : vector<8xf32> to vector<8x1xf32>
    %73 = vector.broadcast %72 : vector<8x1xf32> to vector<8x8xf32>
    %74 = arith.divf %70, %73 : vector<8x8xf32>
    %cst_27 = arith.constant dense<0.000000e+00> : vector<8x8xf32>
    %75 = tpu.matmul %74, %63, %cst_27 {dimension_numbers = #tpu.dot_dimension_numbers<[1], [0], [0], [1], [0, 0, 1, 1], [], []>} : vector<8x8xf32>, vector<8x8xf32>, vector<8x8xf32> -> vector<8x8xf32>
    %76 = vector.extract_strided_slice %2 {offsets = [24, 0], sizes = [8, 32], strides = [1, 1]} : vector<32x32xf32> to vector<8x32xf32>
    %cst_28 = arith.constant dense<0.000000e+00> : vector<8x32xf32>
    %77 = tpu.matmul %75, %76, %cst_28 {dimension_numbers = #tpu.dot_dimension_numbers<[1], [0], [0], [1], [0, 0, 1, 1], [], []>} : vector<8x8xf32>, vector<8x32xf32>, vector<8x32xf32> -> vector<8x32xf32>
    %78 = arith.addf %60, %77 : vector<8x32xf32>
    %c0_29 = arith.constant 0 : index
    %c0_30 = arith.constant 0 : index
    %79 = vector.load %arg4[%c0_29, %c0_30] : memref<1x32xf32, #tpu.memory_space<vmem>>, vector<1x32xf32>
    %80 = vector.broadcast %79 : vector<1x32xf32> to vector<8x32xf32>
    %81 = arith.addf %78, %80 : vector<8x32xf32>
    %c0_31 = arith.constant 0 : index
    %c0_32 = arith.constant 0 : index
    %c0_33 = arith.constant 0 : index
    %82 = vector.load %arg6[%c0_31, %c0_32, %c0_33] : memref<1x8x32xf32, #tpu.memory_space<vmem>>, vector<1x8x32xf32>
    %83 = vector.shape_cast %82 : vector<1x8x32xf32> to vector<8x32xf32>
    %84 = vector.shape_cast %81 : vector<8x32xf32> to vector<1x8x32xf32>
    tpu.vector_store %arg6[%c0_31, %c0_32, %c0_33], %84 {strides = array<i32>} : memref<1x8x32xf32, #tpu.memory_space<vmem>>, vector<1x8x32xf32>,
    return
  }
  func.func @transform_0(%arg0: i32) -> (i32, i32, i32) {
    %c0_i32 = arith.constant 0 : i32
    %c0_i32_0 = arith.constant 0 : i32
    %c0_i32_1 = arith.constant 0 : i32
    return %arg0, %c0_i32, %c0_i32_0 : i32, i32, i32
  }
  func.func @transform_1(%arg0: i32) -> (i32, i32) {
    %c0_i32 = arith.constant 0 : i32
    %c0_i32_0 = arith.constant 0 : i32
    %c0_i32_1 = arith.constant 0 : i32
    return %c0_i32, %c0_i32_0 : i32, i32
  }
  func.func @transform_2(%arg0: i32) -> (i32, i32) {
    %c0_i32 = arith.constant 0 : i32
    %c0_i32_0 = arith.constant 0 : i32
    %c0_i32_1 = arith.constant 0 : i32
    return %c0_i32, %c0_i32_0 : i32, i32
  }
  func.func @transform_3(%arg0: i32) -> (i32, i32) {
    %c0_i32 = arith.constant 0 : i32
    %c0_i32_0 = arith.constant 0 : i32
    %c0_i32_1 = arith.constant 0 : i32
    return %c0_i32, %c0_i32_0 : i32, i32
  }
  func.func @transform_4(%arg0: i32) -> (i32, i32) {
    %c0_i32 = arith.constant 0 : i32
    %c0_i32_0 = arith.constant 0 : i32
    %c0_i32_1 = arith.constant 0 : i32
    return %c0_i32, %c0_i32_0 : i32, i32
  }
  func.func @transform_5(%arg0: i32) -> (i32, i32, i32) {
    %c0_i32 = arith.constant 0 : i32
    %c0_i32_0 = arith.constant 0 : i32
    %c0_i32_1 = arith.constant 0 : i32
    return %arg0, %c0_i32, %c0_i32_0 : i32, i32, i32
  }
}

</mosaic_0001>

<llo_original>
// kernel: tpu_custom_call.1
$region0: #{tpu_custom_call.1}
  #allocation0 [shape = 'u32[]', space=smem, size = 0x4, offset = 0x4, fixed_abs, tag = 'smem constant byte address 0x4 - core index']
  #allocation1 [shape = 'u32[72,128]{1,0:T(1,128)}', space=vmem, size = 0x9000, scoped, tag = 'internal scratch']
  %s0 = inlined_call_operand.hbm [shape: f32[2,8,32], index: 0, kind: input, shape index: {}]
  %s1 = inlined_call_operand.hbm [shape: f32[32,96], index: 1, kind: input, shape index: {}]
  %s2 = inlined_call_operand.hbm [shape: f32[32,32], index: 2, kind: input, shape index: {}]
  %s3 = inlined_call_operand.vmem [shape: f32[1,32], index: 3, kind: input, shape index: {}]
  %s4 = inlined_call_operand.hbm [shape: f32[8,8], index: 4, kind: input, shape index: {}]
  %s5 = inlined_call_operand.hbm [shape: f32[2,8,32], index: 5, kind: output, shape index: {}]
  %s6 = sld [smem:[#allocation0]]
  $region69: #{tpu_custom_call.1} parent=0
    _
  %s8 = ssub.s32 1, %s6
  %s9 = scalar_select 0, %s8, %s6
  $region1: #{tpu_custom_call.1} parent=0
    #allocation2 [shape = 'u8[8192]{0}', space=vmem, size = 0x2000, scoped, tag = 'input window, operand 0']
    #allocation3 [shape = 's32[2]{0}', space=sflag, size = 0x8, scoped, tag = 'scoped memory for tpu_custom_call.1']
    #allocation4 [shape = 's32[2]{0}', space=sflag, size = 0x8, scoped, tag = 'scoped memory for tpu_custom_call.1']
    #allocation5 [shape = 'u8[16384]{0}', space=vmem, size = 0x4000, scoped, tag = 'input window, operand 1, single buffered']
    #allocation6 [shape = 's32[1]{0}', space=sflag, size = 0x4, scoped, tag = 'scoped memory for tpu_custom_call.1']
    #allocation7 [shape = 'u8[16384]{0}', space=vmem, size = 0x4000, scoped, tag = 'input window, operand 2, single buffered']
    #allocation8 [shape = 'u8[4096]{0}', space=vmem, size = 0x1000, scoped, tag = 'input window, operand 4, single buffered']
    #allocation9 [shape = 's32[1]{0}', space=sflag, size = 0x4, scoped, tag = 'scoped memory for tpu_custom_call.1']
    #allocation10 [shape = 'u8[8192]{0}', space=vmem, size = 0x2000, scoped, tag = 'output window, operand 0']
    %10 = vsyncpa [#allocation3], 0
    %s11 = scalar_lea.sflag [#allocation3], 1
    %12 = vsyncpa %s11, 0
    %13 = vsyncpa [#allocation6], 0
    %14 = vsyncpa [#allocation9], 0
    %15 = vsyncpa [#allocation4], 0
    %s16 = scalar_lea.sflag [#allocation4], 1
    %17 = vsyncpa %s16, 0
    loop: start=0, step=1, limit=4
    $region2: #{tpu_custom_call.1} parent=1 // loop_pre_header
      _
    $region3: #{tpu_custom_call.1} parent=1 // loop_header
      %s19 = sphi 0, %s23
      %p20 = scmp.ge.s32.totalorder %s19, 4
      %s29 = sphi 0, %s31
      %s32 = sphi 0, %s29
      %s33 = sphi 0, %s32
      %s49 = sphi 0, %s33
      %s53 = sphi 0, %s53
      %s55 = sphi 0, %s53
      %s56 = sphi 0, %s55
      %s70 = sphi 0, %s56
      %s74 = sphi 0, %s74
      %s76 = sphi 0, %s74
      %s77 = sphi 0, %s76
      %s91 = sphi 0, %s77
      %s95 = sphi 0, %s95
      %s97 = sphi 0, %s95
      %s98 = sphi 0, %s97
      %s112 = sphi 0, %s98
      %s116 = sphi 0, %s116
      %s118 = sphi 0, %s116
      %s119 = sphi 0, %s118
      %s133 = sphi 0, %s119
      %s139 = sphi 0, %s141
      %s142 = sphi 0, %s139
      %s143 = sphi 0, %s142
      %s159 = sphi 0, %s143
    $region4: #{tpu_custom_call.1} parent=1 // loop_header_branch
      %22 = sbr.rel (%p20) target = $region8
    $region5: #{tpu_custom_call.1} parent=1 // loop_body
      %s24 = ssub.s32 %s19, 1
      %s25 = ssub.s32 %s19, 2
      %s26 = sadd.s32 %s19, 1
      %s27 = ssub.s32 %s19, %s26
      %p28 = scmp.eq.s32.totalorder %s27, 0
      %s30 = sadd.s32 %s29, 1
      %s31 = scalar_select %p28, %s29, %s30
      %p34 = pneg %p28
      %p35 = scmp.eq.s32.totalorder %s19, 1
      %p36 = por %p34, %p35
      %p37 = scmp.ne.s32.totalorder %s29, %s32
      %p38 = scmp.eq.s32.totalorder %s19, 0
      %p39 = por %p37, %p38
      %p40 = scmp.ne.s32.totalorder %s29, %s32
      %p41 = scmp.eq.s32.totalorder %s24, 1
      %p42 = por %p40, %p41
      %p43 = scmp.ne.s32.totalorder %s32, %s33
      %p44 = scmp.eq.s32.totalorder %s24, 0
      %p45 = por %p43, %p44
      %p46 = scmp.ne.s32.totalorder %s32, %s33
      %p47 = scmp.eq.s32.totalorder %s25, 1
      %p48 = por %p46, %p47
      %p50 = scmp.ne.s32.totalorder %s33, %s49
      %p51 = scmp.eq.s32.totalorder %s25, 0
      %p52 = por %p50, %p51
      %s54 = sadd.s32 %s53, 1
      %p57 = scmp.eq.s32.totalorder %s19, 1
      %p58 = scmp.ne.s32.totalorder %s53, %s55
      %p59 = scmp.eq.s32.totalorder %s19, 0
      %p60 = por %p58, %p59
      %p61 = scmp.ne.s32.totalorder %s53, %s55
      %p62 = scmp.eq.s32.totalorder %s24, 1
      %p63 = por %p61, %p62
      %p64 = scmp.ne.s32.totalorder %s55, %s56
      %p65 = scmp.eq.s32.totalorder %s24, 0
      %p66 = por %p64, %p65
      %p67 = scmp.ne.s32.totalorder %s55, %s56
      %p68 = scmp.eq.s32.totalorder %s25, 1
      %p69 = por %p67, %p68
      %p71 = scmp.ne.s32.totalorder %s56, %s70
      %p72 = scmp.eq.s32.totalorder %s25, 0
      %p73 = por %p71, %p72
      %s75 = sadd.s32 %s74, 1
      %p78 = scmp.eq.s32.totalorder %s19, 1
      %p79 = scmp.ne.s32.totalorder %s74, %s76
      %p80 = scmp.eq.s32.totalorder %s19, 0
      %p81 = por %p79, %p80
      %p82 = scmp.ne.s32.totalorder %s74, %s76
      %p83 = scmp.eq.s32.totalorder %s24, 1
      %p84 = por %p82, %p83
      %p85 = scmp.ne.s32.totalorder %s76, %s77
      %p86 = scmp.eq.s32.totalorder %s24, 0
      %p87 = por %p85, %p86
      %p88 = scmp.ne.s32.totalorder %s76, %s77
      %p89 = scmp.eq.s32.totalorder %s25, 1
      %p90 = por %p88, %p89
      %p92 = scmp.ne.s32.totalorder %s77, %s91
      %p93 = scmp.eq.s32.totalorder %s25, 0
      %p94 = por %p92, %p93
      %s96 = sadd.s32 %s95, 1
      %p99 = scmp.eq.s32.totalorder %s19, 1
      %p100 = scmp.ne.s32.totalorder %s95, %s97
      %p101 = scmp.eq.s32.totalorder %s19, 0
      %p102 = por %p100, %p101
      %p103 = scmp.ne.s32.totalorder %s95, %s97
      %p104 = scmp.eq.s32.totalorder %s24, 1
      %p105 = por %p103, %p104
      %p106 = scmp.ne.s32.totalorder %s97, %s98
      %p107 = scmp.eq.s32.totalorder %s24, 0
      %p108 = por %p106, %p107
      %p109 = scmp.ne.s32.totalorder %s97, %s98
      %p110 = scmp.eq.s32.totalorder %s25, 1
      %p111 = por %p109, %p110
      %p113 = scmp.ne.s32.totalorder %s98, %s112
      %p114 = scmp.eq.s32.totalorder %s25, 0
      %p115 = por %p113, %p114
      %s117 = sadd.s32 %s116, 1
      %p120 = scmp.eq.s32.totalorder %s19, 1
      %p121 = scmp.ne.s32.totalorder %s116, %s118
      %p122 = scmp.eq.s32.totalorder %s19, 0
      %p123 = por %p121, %p122
      %p124 = scmp.ne.s32.totalorder %s116, %s118
      %p125 = scmp.eq.s32.totalorder %s24, 1
      %p126 = por %p124, %p125
      %p127 = scmp.ne.s32.totalorder %s118, %s119
      %p128 = scmp.eq.s32.totalorder %s24, 0
      %p129 = por %p127, %p128
      %p130 = scmp.ne.s32.totalorder %s118, %s119
      %p131 = scmp.eq.s32.totalorder %s25, 1
      %p132 = por %p130, %p131
      %p134 = scmp.ne.s32.totalorder %s119, %s133
      %p135 = scmp.eq.s32.totalorder %s25, 0
      %p136 = por %p134, %p135
      %s137 = ssub.s32 %s19, %s26
      %p138 = scmp.eq.s32.totalorder %s137, 0
      %s140 = sadd.s32 %s139, 1
      %s141 = scalar_select %p138, %s139, %s140
      %p144 = pneg %p138
      %p145 = scmp.eq.s32.totalorder %s19, 1
      %p146 = por %p144, %p145
      %p147 = scmp.ne.s32.totalorder %s139, %s142
      %p148 = scmp.eq.s32.totalorder %s19, 0
      %p149 = por %p147, %p148
      %p150 = scmp.ne.s32.totalorder %s139, %s142
      %p151 = scmp.eq.s32.totalorder %s24, 1
      %p152 = por %p150, %p151
      %p153 = scmp.ne.s32.totalorder %s142, %s143
      %p154 = scmp.eq.s32.totalorder %s24, 0
      %p155 = por %p153, %p154
      %p156 = scmp.ne.s32.totalorder %s142, %s143
      %p157 = scmp.eq.s32.totalorder %s25, 1
      %p158 = por %p156, %p157
      %p160 = scmp.ne.s32.totalorder %s143, %s159
      %p161 = scmp.eq.s32.totalorder %s25, 0
      %p162 = por %p160, %p161
      %p163 = scmp.le.s32.totalorder 1, %s19
      %p164 = scmp.lt.s32.totalorder %s19, 3
      %p165 = pnand %p163, %p164
      %p166 = pneg %p165
      // Predicated region
      $region9: #{tpu_custom_call.1} parent=5 // pred_check
        _
      $region10: #{tpu_custom_call.1} parent=5 // pred_check_branch
        %168 = sbr.rel (%p165) target = $region12
      $region11: #{tpu_custom_call.1} parent=5 // pred_region
        %s169 = ssub.s32 %s19, 1
        // Predicated region
        $region13: #{tpu_custom_call.1} parent=11 // pred_check
          %p170 = pneg %p66
        $region14: #{tpu_custom_call.1} parent=11 // pred_check_branch
          %172 = sbr.rel (%p170) target = $region16
        $region15: #{tpu_custom_call.1} parent=11 // pred_region
          %174 = vsyncadd [#allocation6], 0
          %s175 = sshll.u32 %s1, 4
          %s176 = int_to_ptr.hbm [resolvable:$true] %s175
          %s177 = sshll.u32 [#allocation5], 4
          %s178 = int_to_ptr.vmem [resolvable:$true] %s177
          %183 = dma.hbm_to_vmem [thread:$0]  %s176, 512, %s178, [#allocation6], 128, 128, 8
        $region16: #{tpu_custom_call.1} parent=11 // pred_fallthru
          _
        // Predicated region
        $region17: #{tpu_custom_call.1} parent=11 // pred_check
          %p184 = pneg %p87
        $region18: #{tpu_custom_call.1} parent=11 // pred_check_branch
          %186 = sbr.rel (%p184) target = $region20
        $region19: #{tpu_custom_call.1} parent=11 // pred_region
          %188 = vsyncadd [#allocation6], 0
          %s189 = sshll.u32 %s2, 4
          %s190 = int_to_ptr.hbm [resolvable:$true] %s189
          %s191 = sshll.u32 [#allocation7], 4
          %s192 = int_to_ptr.vmem [resolvable:$true] %s191
          %197 = dma.hbm_to_vmem [thread:$0]  %s190, 512, %s192, [#allocation6], 128, 128, 8
        $region20: #{tpu_custom_call.1} parent=11 // pred_fallthru
          _
        // Predicated region
        $region21: #{tpu_custom_call.1} parent=11 // pred_check
          %p198 = pneg %p108
        $region22: #{tpu_custom_call.1} parent=11 // pred_check_branch
          %200 = sbr.rel (%p198) target = $region24
        $region23: #{tpu_custom_call.1} parent=11 // pred_region
          _
        $region24: #{tpu_custom_call.1} parent=11 // pred_fallthru
          _
        // Predicated region
        $region25: #{tpu_custom_call.1} parent=11 // pred_check
          %p201 = pneg %p129
        $region26: #{tpu_custom_call.1} parent=11 // pred_check_branch
          %203 = sbr.rel (%p201) target = $region28
        $region27: #{tpu_custom_call.1} parent=11 // pred_region
          %205 = vsyncadd [#allocation9], 0
          %s207 = sshll.u32 %s4, 4
          %s208 = int_to_ptr.hbm [resolvable:$true] %s207
          %s209 = sshll.u32 [#allocation8], 4
          %s210 = int_to_ptr.vmem [resolvable:$true] %s209
          %212 = dma.hbm_to_vmem [thread:$0]  %s208, 128, %s210, [#allocation9]
        $region28: #{tpu_custom_call.1} parent=11 // pred_fallthru
          _
      $region12: #{tpu_custom_call.1} parent=5 // pred_fallthru
        _
      %p213 = scmp.lt.s32.totalorder %s19, 2
      // Predicated region
      $region29: #{tpu_custom_call.1} parent=5 // pred_check
        %p214 = pneg %p213
      $region30: #{tpu_custom_call.1} parent=5 // pred_check_branch
        %216 = sbr.rel (%p214) target = $region32
      $region31: #{tpu_custom_call.1} parent=5 // pred_region
        // Predicated region
        $region33: #{tpu_custom_call.1} parent=31 // pred_check
          %p217 = pneg %p39
        $region34: #{tpu_custom_call.1} parent=31 // pred_check_branch
          %219 = sbr.rel (%p217) target = $region36
        $region35: #{tpu_custom_call.1} parent=31 // pred_region
          %s220 = sand.u32 %s29, 1
          %s221 = scalar_lea.sflag [#allocation3], %s220
          %s222 = sand.u32 %s29, 1
          %s223 = smul.addr %s222, 8
          %s224 = scalar_lea.vmem [#allocation2], %s223
          %226 = vsyncadd %s221, 0
          %s227 = smul.addr %s19, 8
          %s228 = scalar_lea.hbm %s0, %s227
          %s230 = sshll.u32 %s228, 4
          %s231 = int_to_ptr.hbm [resolvable:$true] %s230
          %s232 = sshll.u32 %s224, 4
          %s233 = int_to_ptr.vmem [resolvable:$true] %s232
          %235 = dma.hbm_to_vmem [thread:$0]  %s231, 128, %s233, %s221
        $region36: #{tpu_custom_call.1} parent=31 // pred_fallthru
          _
      $region32: #{tpu_custom_call.1} parent=5 // pred_fallthru
        _
      %p236 = scmp.le.s32.totalorder 1, %s19
      %p237 = scmp.lt.s32.totalorder %s19, 3
      %p238 = pnand %p236, %p237
      %p239 = pneg %p238
      // Predicated region
      $region37: #{tpu_custom_call.1} parent=5 // pred_check
        _
      $region38: #{tpu_custom_call.1} parent=5 // pred_check_branch
        %241 = sbr.rel (%p238) target = $region40
      $region39: #{tpu_custom_call.1} parent=5 // pred_region
        %s242 = ssub.s32 %s19, 1
        %s243 = sand.u32 %s32, 1
        %s244 = scalar_lea.sflag [#allocation3], %s243
        %s245 = sand.u32 %s32, 1
        %s246 = smul.addr %s245, 8
        %s247 = scalar_lea.vmem [#allocation2], %s246
        // Predicated region
        $region41: #{tpu_custom_call.1} parent=39 // pred_check
          %p248 = pneg %p45
        $region42: #{tpu_custom_call.1} parent=39 // pred_check_branch
          %250 = sbr.rel (%p248) target = $region44
        $region43: #{tpu_custom_call.1} parent=39 // pred_region
          %252 = dma.done %s244, 128
        $region44: #{tpu_custom_call.1} parent=39 // pred_fallthru
          _
        // Predicated region
        $region45: #{tpu_custom_call.1} parent=39 // pred_check
          %p253 = pneg %p66
        $region46: #{tpu_custom_call.1} parent=39 // pred_check_branch
          %255 = sbr.rel (%p253) target = $region48
        $region47: #{tpu_custom_call.1} parent=39 // pred_region
          %257 = dma.done [#allocation6], 512
        $region48: #{tpu_custom_call.1} parent=39 // pred_fallthru
          _
        // Predicated region
        $region49: #{tpu_custom_call.1} parent=39 // pred_check
          %p258 = pneg %p87
        $region50: #{tpu_custom_call.1} parent=39 // pred_check_branch
          %260 = sbr.rel (%p258) target = $region52
        $region51: #{tpu_custom_call.1} parent=39 // pred_region
          %262 = dma.done [#allocation6], 512
        $region52: #{tpu_custom_call.1} parent=39 // pred_fallthru
          _
        // Predicated region
        $region53: #{tpu_custom_call.1} parent=39 // pred_check
          %p263 = pneg %p129
        $region54: #{tpu_custom_call.1} parent=39 // pred_check_branch
          %265 = sbr.rel (%p263) target = $region56
        $region55: #{tpu_custom_call.1} parent=39 // pred_region
          %267 = dma.done [#allocation9], 128
        $region56: #{tpu_custom_call.1} parent=39 // pred_fallthru
          _
        %s268 = sand.u32 %s32, 1
        %s269 = scalar_lea.sflag [#allocation3], %s268
        %s270 = sand.u32 %s32, 1
        %s271 = smul.addr %s270, 8
        %s272 = scalar_lea.vmem [#allocation2], %s271
        %p273 = pneg %p45
        %p274 = pneg %p42
        %p275 = pneg %p66
        %p276 = pneg %p63
        %p277 = pneg %p87
        %p278 = pneg %p84
        %p279 = pneg %p108
        %p280 = pneg %p105
        %p281 = pneg %p129
        %p282 = pneg %p126
        %p283 = pneg %p155
        %p284 = pneg %p152
        %s285 = sand.u32 %s142, 1
        %s286 = scalar_lea.sflag [#allocation4], %s285
        %s287 = sand.u32 %s142, 1
        %s288 = smul.addr %s287, 8
        %s289 = scalar_lea.vmem [#allocation10], %s288
        %v290 = vld [vmem:[%s247] sm:$0xff]
        %v291 = vld [vmem:[#allocation7] sm:$0xff]
        %v292 = vld [vmem:[#allocation7 + $0x8] sm:$0xff]
        %v293 = vld [vmem:[#allocation7 + $0x10] sm:$0xff]
        %v294 = vld [vmem:[#allocation7 + $0x18] sm:$0xff]
        %v295 = vld [vmem:[#allocation8] sm:$0xff]
        %v296 = vld [vmem:[#allocation5] sm:$0xff]
        %v297 = vld [vmem:[#allocation5 + $0x8] sm:$0xff]
        %v298 = vld [vmem:[#allocation5 + $0x10] sm:$0xff]
        %v299 = vld [vmem:[#allocation5 + $0x18] sm:$0xff]
        %vm300 = vcmask 261120
        %v302 = vsel %vm300, %v290, 0
        %304 = vmatpush.msra.mxu0 0.0
        %305 = vmatpush.msra.mxu0 0.0
        %306 = vmatpush.msra.mxu0 0.0
        %307 = vmatpush.msra.mxu0 0.0
        %308 = vmatpush.msra.mxu0 0.0
        %309 = vmatpush.msra.mxu0 0.0
        %310 = vmatpush.msra.mxu0 0.0
        %311 = vmatpush.msra.mxu0 0.0
        %312 = vmatpush.msra.mxu0 0.0
        %313 = vmatpush.msra.mxu0 0.0
        %314 = vmatpush.msra.mxu0 0.0
        %315 = vmatpush.msra.mxu0 0.0
        %316 = vmatpush.msra.mxu0 %v299
        %317 = vmatpush.msra.mxu0 %v298
        %318 = vmatpush.msra.mxu0 %v297
        %319 = vmatpush.msra.mxu0 %v296
        %320 = vmatmul.f32.gmra.mxu0 %v302
        %v321 = vpop.f32.mrf.mxu0
        %v322 = vadd.f32 0.0, %v321
        %323 = vdwg.mxu0
        %325 = vrot.lane.b32.xlu0 %v322, 96
        %v326 = vpop.permute.xlu0 %325
        %vm327 = vcmask 64512
        %v328 = vsel %vm327, %v322, 0
        %v330 = vsel %vm327, %v326, 0
        %332 = vmatpush.xpose.msra.mxu0 0.0
        %333 = vmatpush.xpose.msra.mxu0 0.0
        %334 = vmatpush.xpose.msra.mxu0 0.0
        %335 = vmatpush.xpose.msra.mxu0 0.0
        %336 = vmatpush.xpose.msra.mxu0 0.0
        %337 = vmatpush.xpose.msra.mxu0 0.0
        %338 = vmatpush.xpose.msra.mxu0 0.0
        %339 = vmatpush.xpose.msra.mxu0 0.0
        %340 = vmatpush.xpose.msra.mxu0 0.0
        %341 = vmatpush.xpose.msra.mxu0 0.0
        %342 = vmatpush.xpose.msra.mxu0 0.0
        %343 = vmatpush.xpose.msra.mxu0 0.0
        %344 = vmatpush.xpose.msra.mxu0 0.0
        %345 = vmatpush.xpose.msra.mxu0 0.0
        %346 = vmatpush.xpose.msra.mxu0 0.0
        %347 = vmatpush.xpose.msra.mxu0 %v330
        %348 = vmatmul.f32.gmra.mxu0 %v328
        %v349 = vpop.f32.mrf.mxu0
        %v350 = vadd.f32 %v295, %v349
        %351 = vdwg.mxu0
        %v352 = vsel %vm327, %v350, -inf
        %353 = vmax.xlane.f32.xlu0 %v352
        %v354 = vpop.xlane.xlu0 %353
        %v355 = vsub.f32 %v350, %v354
        %v356 = vmul.f32 %v355, 1.442695
        %v357 = vpow.pop %v356
        %v358 = vsel %vm327, %v357, 0.0
        %359 = vadd.xlane.f32.xlu0 %v358
        %v360 = vpop.xlane.xlu0 %359
        %v361 = vrcp.pop %v360
        %v362 = vmul.f32 %v360, %v361
        %v363 = vsub.f32 1.0, %v362
        %v364 = vmul.f32 %v361, %v363
        %v365 = vadd.f32 %v361, %v364
        %vm366 = vweird.f32 %v360
        %vm367 = vweird.f32 %v361
        %vm368 = vmor %vm366, %vm367
        %v369 = vsel %vm368, %v361, %v365
        %v370 = vand.u32 2147483647, %v360
        %vm371 = vcmp.eq.f32.partialorder %v370, 8.507059e+37
        %v372 = vand.u32 %v360, 2147483648
        %v373 = vor.u32 1.1754944e-38, %v372
        %v374 = vsel %vm371, %v373, %v369
        %v375 = vmul.f32 %v357, %v374
        %376 = vrot.lane.b32.xlu0 %v322, 64
        %v377 = vpop.permute.xlu0 %376
        %v380 = vsel %vm327, %v375, 0
        %382 = vmatpush.msra.mxu0 0.0
        %383 = vmatpush.msra.mxu0 0.0
        %384 = vmatpush.msra.mxu0 0.0
        %385 = vmatpush.msra.mxu0 0.0
        %386 = vmatpush.msra.mxu0 0.0
        %387 = vmatpush.msra.mxu0 0.0
        %388 = vmatpush.msra.mxu0 0.0
        %389 = vmatpush.msra.mxu0 0.0
        %390 = vmatpush.msra.mxu0 0.0
        %391 = vmatpush.msra.mxu0 0.0
        %392 = vmatpush.msra.mxu0 0.0
        %393 = vmatpush.msra.mxu0 0.0
        %394 = vmatpush.msra.mxu0 0.0
        %395 = vmatpush.msra.mxu0 0.0
        %396 = vmatpush.msra.mxu0 0.0
        %397 = vmatpush.msra.mxu0 %v377
        %398 = vmatmul.f32.gmra.mxu0 %v380
        %v399 = vpop.f32.mrf.mxu0
        %v400 = vadd.f32 0.0, %v399
        %401 = vdwg.mxu0
        %402 = vrot.lane.b32.xlu0 %v322, 120
        %v403 = vpop.permute.xlu0 %402
        %404 = vrot.lane.b32.xlu0 %v322, 88
        %v405 = vpop.permute.xlu0 %404
        %v406 = vsel %vm327, %v403, 0
        %v408 = vsel %vm327, %v405, 0
        %410 = vmatpush.xpose.msra.mxu0 0.0
        %411 = vmatpush.xpose.msra.mxu0 0.0
        %412 = vmatpush.xpose.msra.mxu0 0.0
        %413 = vmatpush.xpose.msra.mxu0 0.0
        %414 = vmatpush.xpose.msra.mxu0 0.0
        %415 = vmatpush.xpose.msra.mxu0 0.0
        %416 = vmatpush.xpose.msra.mxu0 0.0
        %417 = vmatpush.xpose.msra.mxu0 0.0
        %418 = vmatpush.xpose.msra.mxu0 0.0
        %419 = vmatpush.xpose.msra.mxu0 0.0
        %420 = vmatpush.xpose.msra.mxu0 0.0
        %421 = vmatpush.xpose.msra.mxu0 0.0
        %422 = vmatpush.xpose.msra.mxu0 0.0
        %423 = vmatpush.xpose.msra.mxu0 0.0
        %424 = vmatpush.xpose.msra.mxu0 0.0
        %425 = vmatpush.xpose.msra.mxu0 %v408
        %426 = vmatmul.f32.gmra.mxu0 %v406
        %v427 = vpop.f32.mrf.mxu0
        %v428 = vadd.f32 %v295, %v427
        %429 = vdwg.mxu0
        %v430 = vsel %vm327, %v428, -inf
        %431 = vmax.xlane.f32.xlu0 %v430
        %v432 = vpop.xlane.xlu0 %431
        %v433 = vsub.f32 %v428, %v432
        %v434 = vmul.f32 %v433, 1.442695
        %v435 = vpow.pop %v434
        %v436 = vsel %vm327, %v435, 0.0
        %437 = vadd.xlane.f32.xlu0 %v436
        %v438 = vpop.xlane.xlu0 %437
        %v439 = vrcp.pop %v438
        %v440 = vmul.f32 %v438, %v439
        %v441 = vsub.f32 1.0, %v440
        %v442 = vmul.f32 %v439, %v441
        %v443 = vadd.f32 %v439, %v442
        %vm444 = vweird.f32 %v438
        %vm445 = vweird.f32 %v439
        %vm446 = vmor %vm444, %vm445
        %v447 = vsel %vm446, %v439, %v443
        %v448 = vand.u32 2147483647, %v438
        %vm449 = vcmp.eq.f32.partialorder %v448, 8.507059e+37
        %v450 = vand.u32 %v438, 2147483648
        %v451 = vor.u32 1.1754944e-38, %v450
        %v452 = vsel %vm449, %v451, %v447
        %v453 = vmul.f32 %v435, %v452
        %454 = vrot.lane.b32.xlu0 %v322, 56
        %v455 = vpop.permute.xlu0 %454
        %v458 = vsel %vm327, %v453, 0
        %460 = vmatpush.msra.mxu0 0.0
        %461 = vmatpush.msra.mxu0 0.0
        %462 = vmatpush.msra.mxu0 0.0
        %463 = vmatpush.msra.mxu0 0.0
        %464 = vmatpush.msra.mxu0 0.0
        %465 = vmatpush.msra.mxu0 0.0
        %466 = vmatpush.msra.mxu0 0.0
        %467 = vmatpush.msra.mxu0 0.0
        %468 = vmatpush.msra.mxu0 0.0
        %469 = vmatpush.msra.mxu0 0.0
        %470 = vmatpush.msra.mxu0 0.0
        %471 = vmatpush.msra.mxu0 0.0
        %472 = vmatpush.msra.mxu0 0.0
        %473 = vmatpush.msra.mxu0 0.0
        %474 = vmatpush.msra.mxu0 0.0
        %475 = vmatpush.msra.mxu0 %v455
        %476 = vmatmul.f32.gmra.mxu0 %v458
        %v477 = vpop.f32.mrf.mxu0
        %v478 = vadd.f32 0.0, %v477
        %479 = vdwg.mxu0
        %v481 = vsel %vm327, %v478, 0
        %483 = vmatpush.msra.mxu0 0.0
        %484 = vmatpush.msra.mxu0 0.0
        %485 = vmatpush.msra.mxu0 0.0
        %486 = vmatpush.msra.mxu0 0.0
        %487 = vmatpush.msra.mxu0 0.0
        %488 = vmatpush.msra.mxu0 0.0
        %489 = vmatpush.msra.mxu0 0.0
        %490 = vmatpush.msra.mxu0 0.0
        %491 = vmatpush.msra.mxu0 0.0
        %492 = vmatpush.msra.mxu0 0.0
        %493 = vmatpush.msra.mxu0 0.0
        %494 = vmatpush.msra.mxu0 0.0
        %495 = vmatpush.msra.mxu0 0.0
        %496 = vmatpush.msra.mxu0 0.0
        %497 = vmatpush.msra.mxu0 0.0
        %498 = vmatpush.msra.mxu0 %v292
        %499 = vmatmul.f32.gmra.mxu0 %v481
        %v500 = vpop.f32.mrf.mxu0
        %v501 = vadd.f32 0.0, %v500
        %502 = vdwg.mxu0
        %v504 = vsel %vm327, %v400, 0
        %506 = vmatpush.msra.mxu0 0.0
        %507 = vmatpush.msra.mxu0 0.0
        %508 = vmatpush.msra.mxu0 0.0
        %509 = vmatpush.msra.mxu0 0.0
        %510 = vmatpush.msra.mxu0 0.0
        %511 = vmatpush.msra.mxu0 0.0
        %512 = vmatpush.msra.mxu0 0.0
        %513 = vmatpush.msra.mxu0 0.0
        %514 = vmatpush.msra.mxu0 0.0
        %515 = vmatpush.msra.mxu0 0.0
        %516 = vmatpush.msra.mxu0 0.0
        %517 = vmatpush.msra.mxu0 0.0
        %518 = vmatpush.msra.mxu0 0.0
        %519 = vmatpush.msra.mxu0 0.0
        %520 = vmatpush.msra.mxu0 0.0
        %521 = vmatpush.msra.mxu0 %v291
        %522 = vmatmul.f32.gmra.mxu0 %v504
        %v523 = vpop.f32.mrf.mxu0
        %v524 = vadd.f32 %v501, %v523
        %525 = vdwg.mxu0
        %526 = vrot.lane.b32.xlu0 %v322, 112
        %v527 = vpop.permute.xlu0 %526
        %528 = vrot.lane.b32.xlu0 %v322, 80
        %v529 = vpop.permute.xlu0 %528
        %v530 = vsel %vm327, %v527, 0
        %v532 = vsel %vm327, %v529, 0
        %534 = vmatpush.xpose.msra.mxu0 0.0
        %535 = vmatpush.xpose.msra.mxu0 0.0
        %536 = vmatpush.xpose.msra.mxu0 0.0
        %537 = vmatpush.xpose.msra.mxu0 0.0
        %538 = vmatpush.xpose.msra.mxu0 0.0
        %539 = vmatpush.xpose.msra.mxu0 0.0
        %540 = vmatpush.xpose.msra.mxu0 0.0
        %541 = vmatpush.xpose.msra.mxu0 0.0
        %542 = vmatpush.xpose.msra.mxu0 0.0
        %543 = vmatpush.xpose.msra.mxu0 0.0
        %544 = vmatpush.xpose.msra.mxu0 0.0
        %545 = vmatpush.xpose.msra.mxu0 0.0
        %546 = vmatpush.xpose.msra.mxu0 0.0
        %547 = vmatpush.xpose.msra.mxu0 0.0
        %548 = vmatpush.xpose.msra.mxu0 0.0
        %549 = vmatpush.xpose.msra.mxu0 %v532
        %550 = vmatmul.f32.gmra.mxu0 %v530
        %v551 = vpop.f32.mrf.mxu0
        %v552 = vadd.f32 %v295, %v551
        %553 = vdwg.mxu0
        %v554 = vsel %vm327, %v552, -inf
        %555 = vmax.xlane.f32.xlu0 %v554
        %v556 = vpop.xlane.xlu0 %555
        %v557 = vsub.f32 %v552, %v556
        %v558 = vmul.f32 %v557, 1.442695
        %v559 = vpow.pop %v558
        %v560 = vsel %vm327, %v559, 0.0
        %561 = vadd.xlane.f32.xlu0 %v560
        %v562 = vpop.xlane.xlu0 %561
        %v563 = vrcp.pop %v562
        %v564 = vmul.f32 %v562, %v563
        %v565 = vsub.f32 1.0, %v564
        %v566 = vmul.f32 %v563, %v565
        %v567 = vadd.f32 %v563, %v566
        %vm568 = vweird.f32 %v562
        %vm569 = vweird.f32 %v563
        %vm570 = vmor %vm568, %vm569
        %v571 = vsel %vm570, %v563, %v567
        %v572 = vand.u32 2147483647, %v562
        %vm573 = vcmp.eq.f32.partialorder %v572, 8.507059e+37
        %v574 = vand.u32 %v562, 2147483648
        %v575 = vor.u32 1.1754944e-38, %v574
        %v576 = vsel %vm573, %v575, %v571
        %v577 = vmul.f32 %v559, %v576
        %578 = vrot.lane.b32.xlu0 %v322, 48
        %v579 = vpop.permute.xlu0 %578
        %v582 = vsel %vm327, %v577, 0
        %584 = vmatpush.msra.mxu0 0.0
        %585 = vmatpush.msra.mxu0 0.0
        %586 = vmatpush.msra.mxu0 0.0
        %587 = vmatpush.msra.mxu0 0.0
        %588 = vmatpush.msra.mxu0 0.0
        %589 = vmatpush.msra.mxu0 0.0
        %590 = vmatpush.msra.mxu0 0.0
        %591 = vmatpush.msra.mxu0 0.0
        %592 = vmatpush.msra.mxu0 0.0
        %593 = vmatpush.msra.mxu0 0.0
        %594 = vmatpush.msra.mxu0 0.0
        %595 = vmatpush.msra.mxu0 0.0
        %596 = vmatpush.msra.mxu0 0.0
        %597 = vmatpush.msra.mxu0 0.0
        %598 = vmatpush.msra.mxu0 0.0
        %599 = vmatpush.msra.mxu0 %v579
        %600 = vmatmul.f32.gmra.mxu0 %v582
        %v601 = vpop.f32.mrf.mxu0
        %v602 = vadd.f32 0.0, %v601
        %603 = vdwg.mxu0
        %v605 = vsel %vm327, %v602, 0
        %607 = vmatpush.msra.mxu0 0.0
        %608 = vmatpush.msra.mxu0 0.0
        %609 = vmatpush.msra.mxu0 0.0
        %610 = vmatpush.msra.mxu0 0.0
        %611 = vmatpush.msra.mxu0 0.0
        %612 = vmatpush.msra.mxu0 0.0
        %613 = vmatpush.msra.mxu0 0.0
        %614 = vmatpush.msra.mxu0 0.0
        %615 = vmatpush.msra.mxu0 0.0
        %616 = vmatpush.msra.mxu0 0.0
        %617 = vmatpush.msra.mxu0 0.0
        %618 = vmatpush.msra.mxu0 0.0
        %619 = vmatpush.msra.mxu0 0.0
        %620 = vmatpush.msra.mxu0 0.0
        %621 = vmatpush.msra.mxu0 0.0
        %622 = vmatpush.msra.mxu0 %v293
        %623 = vmatmul.f32.gmra.mxu0 %v605
        %v624 = vpop.f32.mrf.mxu0
        %v625 = vadd.f32 0.0, %v624
        %626 = vdwg.mxu0
        %v627 = vadd.f32 %v524, %v625
        %628 = vrot.lane.b32.xlu0 %v322, 104
        %v629 = vpop.permute.xlu0 %628
        %630 = vrot.lane.b32.xlu0 %v322, 72
        %v631 = vpop.permute.xlu0 %630
        %v632 = vsel %vm327, %v629, 0
        %v634 = vsel %vm327, %v631, 0
        %636 = vmatpush.xpose.msra.mxu0 0.0
        %637 = vmatpush.xpose.msra.mxu0 0.0
        %638 = vmatpush.xpose.msra.mxu0 0.0
        %639 = vmatpush.xpose.msra.mxu0 0.0
        %640 = vmatpush.xpose.msra.mxu0 0.0
        %641 = vmatpush.xpose.msra.mxu0 0.0
        %642 = vmatpush.xpose.msra.mxu0 0.0
        %643 = vmatpush.xpose.msra.mxu0 0.0
        %644 = vmatpush.xpose.msra.mxu0 0.0
        %645 = vmatpush.xpose.msra.mxu0 0.0
        %646 = vmatpush.xpose.msra.mxu0 0.0
        %647 = vmatpush.xpose.msra.mxu0 0.0
        %648 = vmatpush.xpose.msra.mxu0 0.0
        %649 = vmatpush.xpose.msra.mxu0 0.0
        %650 = vmatpush.xpose.msra.mxu0 0.0
        %651 = vmatpush.xpose.msra.mxu0 %v634
        %652 = vmatmul.f32.gmra.mxu0 %v632
        %v653 = vpop.f32.mrf.mxu0
        %v654 = vadd.f32 %v295, %v653
        %655 = vdwg.mxu0
        %v656 = vsel %vm327, %v654, -inf
        %657 = vmax.xlane.f32.xlu0 %v656
        %v658 = vpop.xlane.xlu0 %657
        %v659 = vsub.f32 %v654, %v658
        %v660 = vmul.f32 %v659, 1.442695
        %v661 = vpow.pop %v660
        %v662 = vsel %vm327, %v661, 0.0
        %663 = vadd.xlane.f32.xlu0 %v662
        %v664 = vpop.xlane.xlu0 %663
        %v665 = vrcp.pop %v664
        %v666 = vmul.f32 %v664, %v665
        %v667 = vsub.f32 1.0, %v666
        %v668 = vmul.f32 %v665, %v667
        %v669 = vadd.f32 %v665, %v668
        %vm670 = vweird.f32 %v664
        %vm671 = vweird.f32 %v665
        %vm672 = vmor %vm670, %vm671
        %v673 = vsel %vm672, %v665, %v669
        %v674 = vand.u32 2147483647, %v664
        %vm675 = vcmp.eq.f32.partialorder %v674, 8.507059e+37
        %v676 = vand.u32 %v664, 2147483648
        %v677 = vor.u32 1.1754944e-38, %v676
        %v678 = vsel %vm675, %v677, %v673
        %v679 = vmul.f32 %v661, %v678
        %680 = vrot.lane.b32.xlu0 %v322, 40
        %v681 = vpop.permute.xlu0 %680
        %v684 = vsel %vm327, %v679, 0
        %686 = vmatpush.msra.mxu0 0.0
        %687 = vmatpush.msra.mxu0 0.0
        %688 = vmatpush.msra.mxu0 0.0
        %689 = vmatpush.msra.mxu0 0.0
        %690 = vmatpush.msra.mxu0 0.0
        %691 = vmatpush.msra.mxu0 0.0
        %692 = vmatpush.msra.mxu0 0.0
        %693 = vmatpush.msra.mxu0 0.0
        %694 = vmatpush.msra.mxu0 0.0
        %695 = vmatpush.msra.mxu0 0.0
        %696 = vmatpush.msra.mxu0 0.0
        %697 = vmatpush.msra.mxu0 0.0
        %698 = vmatpush.msra.mxu0 0.0
        %699 = vmatpush.msra.mxu0 0.0
        %700 = vmatpush.msra.mxu0 0.0
        %701 = vmatpush.msra.mxu0 %v681
        %702 = vmatmul.f32.gmra.mxu0 %v684
        %v703 = vpop.f32.mrf.mxu0
        %v704 = vadd.f32 0.0, %v703
        %705 = vdwg.mxu0
        %v707 = vsel %vm327, %v704, 0
        %709 = vmatpush.msra.mxu0 0.0
        %710 = vmatpush.msra.mxu0 0.0
        %711 = vmatpush.msra.mxu0 0.0
        %712 = vmatpush.msra.mxu0 0.0
        %713 = vmatpush.msra.mxu0 0.0
        %714 = vmatpush.msra.mxu0 0.0
        %715 = vmatpush.msra.mxu0 0.0
        %716 = vmatpush.msra.mxu0 0.0
        %717 = vmatpush.msra.mxu0 0.0
        %718 = vmatpush.msra.mxu0 0.0
        %719 = vmatpush.msra.mxu0 0.0
        %720 = vmatpush.msra.mxu0 0.0
        %721 = vmatpush.msra.mxu0 0.0
        %722 = vmatpush.msra.mxu0 0.0
        %723 = vmatpush.msra.mxu0 0.0
        %724 = vmatpush.msra.mxu0 %v294
        %725 = vmatmul.f32.gmra.mxu0 %v707
        %v726 = vpop.f32.mrf.mxu0
        %v727 = vadd.f32 0.0, %v726
        %728 = vdwg.mxu0
        %v729 = vadd.f32 %v627, %v727
        %v730 = vld [vmem:[%s3] sm:$0x1]
        %v732 = vperm.slane %v730, 0
        %v734 = vadd.f32 %v729, %v732
        %735 = vst.msk [vmem:[%s289] sm:$0xff] %vm300, %v734
        %s736 = sand.u32 %s142, 1
        %s737 = scalar_lea.sflag [#allocation4], %s736
        %s738 = sand.u32 %s142, 1
        %s739 = smul.addr %s738, 8
        %s740 = scalar_lea.vmem [#allocation10], %s739
        // Predicated region
        $region57: #{tpu_custom_call.1} parent=39 // pred_check
          %p741 = pneg %p152
        $region58: #{tpu_custom_call.1} parent=39 // pred_check_branch
          %743 = sbr.rel (%p741) target = $region60
        $region59: #{tpu_custom_call.1} parent=39 // pred_region
          %745 = vsyncadd %s737, 0
          %s746 = smul.addr %s24, 8
          %s747 = scalar_lea.hbm %s5, %s746
          %s749 = sshll.u32 %s740, 4
          %s750 = int_to_ptr.vmem [resolvable:$true] %s749
          %s751 = sshll.u32 %s747, 4
          %s752 = int_to_ptr.hbm [resolvable:$true] %s751
          %754 = dma.vmem_to_hbm [thread:$0]  %s750, 128, %s752, %s737
        $region60: #{tpu_custom_call.1} parent=39 // pred_fallthru
          _
      $region40: #{tpu_custom_call.1} parent=5 // pred_fallthru
        _
      %p755 = scmp.le.s32.totalorder 2, %s19
      // Predicated region
      $region61: #{tpu_custom_call.1} parent=5 // pred_check
        %p756 = pneg %p755
      $region62: #{tpu_custom_call.1} parent=5 // pred_check_branch
        %758 = sbr.rel (%p756) target = $region64
      $region63: #{tpu_custom_call.1} parent=5 // pred_region
        %s759 = ssub.s32 %s19, 2
        // Predicated region
        $region65: #{tpu_custom_call.1} parent=63 // pred_check
          %p760 = pneg %p158
        $region66: #{tpu_custom_call.1} parent=63 // pred_check_branch
          %762 = sbr.rel (%p760) target = $region68
        $region67: #{tpu_custom_call.1} parent=63 // pred_region
          %s763 = sand.u32 %s143, 1
          %s764 = scalar_lea.sflag [#allocation4], %s763
          %s765 = sand.u32 %s143, 1
          %s766 = smul.addr %s765, 8
          %s767 = scalar_lea.vmem [#allocation10], %s766
          %769 = dma.done %s764, 128
        $region68: #{tpu_custom_call.1} parent=63 // pred_fallthru
          _
      $region64: #{tpu_custom_call.1} parent=5 // pred_fallthru
        _
    $region6: #{tpu_custom_call.1} parent=1 // loop_footer
      %s23 = sadd.s32 1, %s19
    $region7: #{tpu_custom_call.1} parent=1 // loop_footer_branch
      %18 = sbr.rel target = $region3
    $region8: #{tpu_custom_call.1} parent=1 // loop_exit
      _
    %770 = vsyncpa [#allocation3], 1
    %s771 = scalar_lea.sflag [#allocation3], 1
    %772 = vsyncpa %s771, 1
    %773 = vsyncpa [#allocation6], 1
    %774 = vsyncpa [#allocation9], 1
    %775 = vsyncpa [#allocation4], 1
    %s776 = scalar_lea.sflag [#allocation4], 1
    %777 = vsyncpa %s776, 1

</llo_original>
